<compile_context>
chip_gen: v7x
topology: tpu7x:2x2x1
jax: 0.10.0
libtpu: 0.0.40
codegen_flags: <defaults>
</compile_context>

<pallas_src>
import jax
import jax.numpy as jnp
from jax.experimental import pallas as pl
from jax.experimental.pallas import tpu as pltpu


def actor_kernel(xT_ref, w1_ref, b1_ref, w2_ref, b2_ref, wl_ref, bl_ref, outT_ref):
    # Transposed layout: batch on lanes.  xT is (F_in, TB).
    xT = xT_ref[...]
    # MLP trunk: two Linear + ReLU layers (MLPAgent), weights in (out, in) layout.
    h1 = jnp.dot(w1_ref[...], xT, preferred_element_type=jnp.float32) + b1_ref[...]
    h1 = jnp.maximum(h1, 0.0)                                  # (H, TB)
    h2 = jnp.dot(w2_ref[...], h1, preferred_element_type=jnp.float32) + b2_ref[...]
    h2 = jnp.maximum(h2, 0.0)                                  # (O, TB)
    # self.last: Linear(output_dim -> num_actions)
    logits = jnp.dot(wl_ref[...], h2, preferred_element_type=jnp.float32) + bl_ref[...]
    # F.softmax(out, dim=-1)  == softmax over the num_actions (sublane) axis here.
    m = jnp.max(logits, axis=0, keepdims=True)                 # (1, TB)
    e = jnp.exp(logits - m)                                    # (A, TB)
    inv = pl.reciprocal(jnp.sum(e, axis=0, keepdims=True), approx=True)  # EUP
    outT_ref[...] = e * inv                                    # lane-dense store


def custom_actor_forward(x, params, *, tb=128):
    """Fused CustomActor (MLP path) forward.

    x: (B, F_in) float32 feedback features.
    params: PyTorch-Linear-layout params (W: (out, in), b: (out, 1)).
    returns: (B, num_actions) float32 softmax probabilities.
    """
    w1, b1, w2, b2, wl, bl = params
    B, f_in = x.shape
    hidden = w1.shape[0]
    out_dim = w2.shape[0]
    num_actions = wl.shape[0]

    # Grid over the batch; pad batch up to a multiple of the lane tile.
    num_tiles = pl.cdiv(B, tb)
    b_pad = num_tiles * tb
    xT = x.T                                       # (F_in, B): batch on lanes
    if b_pad != B:
        xT = jnp.pad(xT, ((0, 0), (0, b_pad - B)))

    # Resident (whole-array) spec for weights/biases: DMA'd once per call.
    def resident(arr):
        return pl.BlockSpec(arr.shape, lambda i: (0, 0))

    flops = 2 * b_pad * (f_in * hidden + hidden * out_dim + out_dim * num_actions)
    bytes_accessed = 4 * (
        xT.size + w1.size + b1.size + w2.size + b2.size + wl.size + bl.size
        + num_actions * b_pad
    )
    cost = pl.CostEstimate(
        flops=flops,
        transcendentals=b_pad * (num_actions + 1),   # exp + reciprocal per column
        bytes_accessed=bytes_accessed,
    )

    outT = pl.pallas_call(
        actor_kernel,
        out_shape=jax.ShapeDtypeStruct((num_actions, b_pad), jnp.float32),
        grid=(num_tiles,),
        in_specs=[
            pl.BlockSpec((f_in, tb), lambda i: (0, i)),   # x^T batch tile
            resident(w1), resident(b1),
            resident(w2), resident(b2),
            resident(wl), resident(bl),
        ],
        out_specs=pl.BlockSpec((num_actions, tb), lambda i: (0, i)),
        compiler_params=pltpu.CompilerParams(dimension_semantics=("parallel",)),
        cost_estimate=cost,
    )(xT, w1, b1, w2, b2, wl, bl)

    return outT[:, :B].T                            # back to (B, num_actions)


def init_params(key, f_in, hidden, out_dim, num_actions):
    """Deterministic PyTorch-Linear-style init: U(-1/sqrt(fan_in), 1/sqrt(fan_in)).

    Weights are kept in PyTorch (out_features, in_features) layout; biases are
    stored as (out_features, 1) column vectors for the batch-on-lanes kernel.
    """
    ks = jax.random.split(key, 6)

    def lin(kw, kb, fin, fout):
        bound = 1.0 / jnp.sqrt(jnp.float32(fin))
        w = jax.random.uniform(kw, (fout, fin), jnp.float32, -bound, bound)
        b = jax.random.uniform(kb, (fout, 1), jnp.float32, -bound, bound)
        return w, b

    w1, b1 = lin(ks[0], ks[1], f_in, hidden)            # MLP layer 1
    w2, b2 = lin(ks[2], ks[3], hidden, out_dim)         # MLP layer 2 (-> output_dim)
    wl, bl = lin(ks[4], ks[5], out_dim, num_actions)    # self.last
    return (w1, b1, w2, b2, wl, bl)


if __name__ == "__main__":
    # Shapes consistent with the MLPAgent path of CustomActor.forward:
    # observations -> x_dict['feedback'] of shape (batch, feedback_dim).
    # Batch is a couple of lane tiles so the grid / lane-dense layout is exercised.
    B, F_IN, HIDDEN, OUT_DIM, NUM_ACTIONS = 256, 32, 64, 32, 8

    key = jax.random.PRNGKey(0)
    k_x, k_p = jax.random.split(key)
    x = jax.random.normal(k_x, (B, F_IN), dtype=jnp.float32)
    params = init_params(k_p, F_IN, HIDDEN, OUT_DIM, NUM_ACTIONS)

    logits = custom_actor_forward(x, params)
    logits = jax.block_until_ready(logits)

    # Pure-JAX reference for a quick correctness check.
    w1, b1, w2, b2, wl, bl = params
    h1 = jnp.maximum(x @ w1.T + b1[:, 0], 0.0)
    h2 = jnp.maximum(h1 @ w2.T + b2[:, 0], 0.0)
    ref = jax.nn.softmax(h2 @ wl.T + bl[:, 0], axis=-1)

    assert logits.shape == (B, NUM_ACTIONS)
    # Tolerances account for the approx (EUP) reciprocal in the softmax epilogue.
    assert jnp.allclose(logits, ref, atol=5e-3, rtol=1e-2)
    assert jnp.allclose(jnp.sum(logits, axis=-1), 1.0, atol=1e-2)

    print("KERNEL_OK")
</pallas_src>

<mosaic_0001>
module attributes {stable_mosaic.version = 11 : i64} {
  func.func @actor_kernel(%arg0: i32, %arg1: memref<32x128xf32, #tpu.memory_space<vmem>>, %arg2: memref<64x32xf32, #tpu.memory_space<vmem>>, %arg3: memref<64x1xf32, #tpu.memory_space<vmem>>, %arg4: memref<32x64xf32, #tpu.memory_space<vmem>>, %arg5: memref<32x1xf32, #tpu.memory_space<vmem>>, %arg6: memref<8x32xf32, #tpu.memory_space<vmem>>, %arg7: memref<8x1xf32, #tpu.memory_space<vmem>>, %arg8: memref<8x128xf32, #tpu.memory_space<vmem>>) attributes {dimension_semantics = [#tpu.dimension_semantics<parallel>], iteration_bounds = array<i64: 2>, scalar_prefetch = 0 : i64, scratch_operands = 0 : i64, tpu.core_type = #tpu.core_type<tc>, window_params = [{transform_indices = @transform_0, window_bounds = array<i64: 32, 128>}, {pipeline_mode = #tpu.pipeline_mode<synchronous>, transform_indices = @transform_1, window_bounds = array<i64: 64, 32>}, {pipeline_mode = #tpu.pipeline_mode<synchronous>, transform_indices = @transform_2, window_bounds = array<i64: 64, 1>}, {pipeline_mode = #tpu.pipeline_mode<synchronous>, transform_indices = @transform_3, window_bounds = array<i64: 32, 64>}, {pipeline_mode = #tpu.pipeline_mode<synchronous>, transform_indices = @transform_4, window_bounds = array<i64: 32, 1>}, {pipeline_mode = #tpu.pipeline_mode<synchronous>, transform_indices = @transform_5, window_bounds = array<i64: 8, 32>}, {pipeline_mode = #tpu.pipeline_mode<synchronous>, transform_indices = @transform_6, window_bounds = array<i64: 8, 1>}, {transform_indices = @transform_7, window_bounds = array<i64: 8, 128>}]} {
    %c0 = arith.constant 0 : index
    %c0_0 = arith.constant 0 : index
    %0 = vector.load %arg1[%c0, %c0_0] : memref<32x128xf32, #tpu.memory_space<vmem>>, vector<32x128xf32>
    %c0_1 = arith.constant 0 : index
    %c0_2 = arith.constant 0 : index
    %1 = vector.load %arg2[%c0_1, %c0_2] : memref<64x32xf32, #tpu.memory_space<vmem>>, vector<64x32xf32>
    %cst = arith.constant dense<0.000000e+00> : vector<64x128xf32>
    %2 = tpu.matmul %1, %0, %cst {dimension_numbers = #tpu.dot_dimension_numbers<[1], [0], [0], [1], [0, 0, 1, 1], [], []>} : vector<64x32xf32>, vector<32x128xf32>, vector<64x128xf32> -> vector<64x128xf32>
    %c0_3 = arith.constant 0 : index
    %c0_4 = arith.constant 0 : index
    %3 = vector.load %arg3[%c0_3, %c0_4] : memref<64x1xf32, #tpu.memory_space<vmem>>, vector<64x1xf32>
    %4 = vector.broadcast %3 : vector<64x1xf32> to vector<64x128xf32>
    %5 = arith.addf %2, %4 : vector<64x128xf32>
    %cst_5 = arith.constant 0.000000e+00 : f32
    %6 = vector.broadcast %cst_5 : f32 to vector<64x128xf32>
    %7 = arith.maximumf %5, %6 : vector<64x128xf32>
    %c0_6 = arith.constant 0 : index
    %c0_7 = arith.constant 0 : index
    %8 = vector.load %arg4[%c0_6, %c0_7] : memref<32x64xf32, #tpu.memory_space<vmem>>, vector<32x64xf32>
    %cst_8 = arith.constant dense<0.000000e+00> : vector<32x128xf32>
    %9 = tpu.matmul %8, %7, %cst_8 {dimension_numbers = #tpu.dot_dimension_numbers<[1], [0], [0], [1], [0, 0, 1, 1], [], []>} : vector<32x64xf32>, vector<64x128xf32>, vector<32x128xf32> -> vector<32x128xf32>
    %c0_9 = arith.constant 0 : index
    %c0_10 = arith.constant 0 : index
    %10 = vector.load %arg5[%c0_9, %c0_10] : memref<32x1xf32, #tpu.memory_space<vmem>>, vector<32x1xf32>
    %11 = vector.broadcast %10 : vector<32x1xf32> to vector<32x128xf32>
    %12 = arith.addf %9, %11 : vector<32x128xf32>
    %cst_11 = arith.constant 0.000000e+00 : f32
    %13 = vector.broadcast %cst_11 : f32 to vector<32x128xf32>
    %14 = arith.maximumf %12, %13 : vector<32x128xf32>
    %c0_12 = arith.constant 0 : index
    %c0_13 = arith.constant 0 : index
    %15 = vector.load %arg6[%c0_12, %c0_13] : memref<8x32xf32, #tpu.memory_space<vmem>>, vector<8x32xf32>
    %cst_14 = arith.constant dense<0.000000e+00> : vector<8x128xf32>
    %16 = tpu.matmul %15, %14, %cst_14 {dimension_numbers = #tpu.dot_dimension_numbers<[1], [0], [0], [1], [0, 0, 1, 1], [], []>} : vector<8x32xf32>, vector<32x128xf32>, vector<8x128xf32> -> vector<8x128xf32>
    %c0_15 = arith.constant 0 : index
    %c0_16 = arith.constant 0 : index
    %17 = vector.load %arg7[%c0_15, %c0_16] : memref<8x1xf32, #tpu.memory_space<vmem>>, vector<8x1xf32>
    %18 = vector.broadcast %17 : vector<8x1xf32> to vector<8x128xf32>
    %19 = arith.addf %16, %18 : vector<8x128xf32>
    %cst_17 = arith.constant dense<0xFF800000> : vector<128xf32>
    %20 = vector.multi_reduction <maximumf>, %19, %cst_17 [0] : vector<8x128xf32> to vector<128xf32>
    %21 = vector.shape_cast %20 : vector<128xf32> to vector<1x128xf32>
    %22 = vector.broadcast %21 : vector<1x128xf32> to vector<8x128xf32>
    %23 = arith.subf %19, %22 : vector<8x128xf32>
    %24 = math.exp %23 : vector<8x128xf32>
    %cst_18 = arith.constant dense<0.000000e+00> : vector<128xf32>
    %25 = vector.multi_reduction <add>, %24, %cst_18 [0] : vector<8x128xf32> to vector<128xf32>
    %26 = vector.shape_cast %25 : vector<128xf32> to vector<1x128xf32>
    %27 = tpu.reciprocal %26 {approx = true} : vector<1x128xf32> -> vector<1x128xf32>
    %28 = vector.broadcast %27 : vector<1x128xf32> to vector<8x128xf32>
    %29 = arith.mulf %24, %28 : vector<8x128xf32>
    %c0_19 = arith.constant 0 : index
    %c0_20 = arith.constant 0 : index
    %30 = vector.load %arg8[%c0_19, %c0_20] : memref<8x128xf32, #tpu.memory_space<vmem>>, vector<8x128xf32>
    tpu.vector_store %arg8[%c0_19, %c0_20], %29 {strides = array<i32>} : memref<8x128xf32, #tpu.memory_space<vmem>>, vector<8x128xf32>,
    return
  }
  func.func @transform_0(%arg0: i32) -> (i32, i32) {
    %c0_i32 = arith.constant 0 : i32
    %c0_i32_0 = arith.constant 0 : i32
    return %c0_i32, %arg0 : i32, i32
  }
  func.func @transform_1(%arg0: i32) -> (i32, i32) {
    %c0_i32 = arith.constant 0 : i32
    %c0_i32_0 = arith.constant 0 : i32
    %c0_i32_1 = arith.constant 0 : i32
    return %c0_i32, %c0_i32_0 : i32, i32
  }
  func.func @transform_2(%arg0: i32) -> (i32, i32) {
    %c0_i32 = arith.constant 0 : i32
    %c0_i32_0 = arith.constant 0 : i32
    %c0_i32_1 = arith.constant 0 : i32
    return %c0_i32, %c0_i32_0 : i32, i32
  }
  func.func @transform_3(%arg0: i32) -> (i32, i32) {
    %c0_i32 = arith.constant 0 : i32
    %c0_i32_0 = arith.constant 0 : i32
    %c0_i32_1 = arith.constant 0 : i32
    return %c0_i32, %c0_i32_0 : i32, i32
  }
  func.func @transform_4(%arg0: i32) -> (i32, i32) {
    %c0_i32 = arith.constant 0 : i32
    %c0_i32_0 = arith.constant 0 : i32
    %c0_i32_1 = arith.constant 0 : i32
    return %c0_i32, %c0_i32_0 : i32, i32
  }
  func.func @transform_5(%arg0: i32) -> (i32, i32) {
    %c0_i32 = arith.constant 0 : i32
    %c0_i32_0 = arith.constant 0 : i32
    %c0_i32_1 = arith.constant 0 : i32
    return %c0_i32, %c0_i32_0 : i32, i32
  }
  func.func @transform_6(%arg0: i32) -> (i32, i32) {
    %c0_i32 = arith.constant 0 : i32
    %c0_i32_0 = arith.constant 0 : i32
    %c0_i32_1 = arith.constant 0 : i32
    return %c0_i32, %c0_i32_0 : i32, i32
  }
  func.func @transform_7(%arg0: i32) -> (i32, i32) {
    %c0_i32 = arith.constant 0 : i32
    %c0_i32_0 = arith.constant 0 : i32
    return %c0_i32, %arg0 : i32, i32
  }
}

</mosaic_0001>

<llo_original>
// kernel: tpu_custom_call.1
$region0: #{tpu_custom_call.1}
  #allocation0 [shape = 'u32[]', space=smem, size = 0x4, offset = 0x4, fixed_abs, tag = 'smem constant byte address 0x4 - core index']
  #allocation1 [shape = 'u32[144,128]{1,0:T(1,128)}', space=vmem, size = 0x12000, scoped, tag = 'internal scratch']
  %s0 = inlined_call_operand.vmem [shape: f32[32,256], index: 0, kind: input, shape index: {}]
  %s1 = inlined_call_operand.vmem [shape: f32[64,32], index: 1, kind: input, shape index: {}]
  %s2 = inlined_call_operand.vmem [shape: f32[64,1], index: 2, kind: input, shape index: {}]
  %s3 = inlined_call_operand.vmem [shape: f32[32,64], index: 3, kind: input, shape index: {}]
  %s4 = inlined_call_operand.vmem [shape: f32[32,1], index: 4, kind: input, shape index: {}]
  %s5 = inlined_call_operand.vmem [shape: f32[8,32], index: 5, kind: input, shape index: {}]
  %s6 = inlined_call_operand.vmem [shape: f32[8,1], index: 6, kind: input, shape index: {}]
  %s7 = inlined_call_operand.hbm [shape: f32[8,256], index: 7, kind: output, shape index: {}]
  %s8 = sld [smem:[#allocation0]]
  $region99: #{tpu_custom_call.1} parent=0
    _
  %s10 = ssub.s32 1, %s8
  %s11 = scalar_select 0, %s10, %s8
  $region1: #{tpu_custom_call.1} parent=0
    #allocation2 [shape = 'u8[32768]{0}', space=vmem, size = 0x8000, scoped, tag = 'input window, operand 0']
    #allocation3 [shape = 'u8[8192]{0}', space=vmem, size = 0x2000, scoped, tag = 'output window, operand 0']
    #allocation4 [shape = 's32[2]{0}', space=sflag, size = 0x8, scoped, tag = 'scoped memory for tpu_custom_call.1']
    %12 = vsyncpa [#allocation4], 0
    %s13 = scalar_lea.sflag [#allocation4], 1
    %14 = vsyncpa %s13, 0
    loop: start=0, step=1, limit=4
    $region2: #{tpu_custom_call.1} parent=1 // loop_pre_header
      _
    $region3: #{tpu_custom_call.1} parent=1 // loop_header
      %s16 = sphi 0, %s20
      %p17 = scmp.ge.s32.totalorder %s16, 4
      %s26 = sphi 0, %s28
      %s29 = sphi 0, %s26
      %s30 = sphi 0, %s29
      %s46 = sphi 0, %s30
      %s50 = sphi 0, %s50
      %s52 = sphi 0, %s50
      %s53 = sphi 0, %s52
      %s67 = sphi 0, %s53
      %s71 = sphi 0, %s71
      %s73 = sphi 0, %s71
      %s74 = sphi 0, %s73
      %s88 = sphi 0, %s74
      %s92 = sphi 0, %s92
      %s94 = sphi 0, %s92
      %s95 = sphi 0, %s94
      %s109 = sphi 0, %s95
      %s113 = sphi 0, %s113
      %s115 = sphi 0, %s113
      %s116 = sphi 0, %s115
      %s130 = sphi 0, %s116
      %s134 = sphi 0, %s134
      %s136 = sphi 0, %s134
      %s137 = sphi 0, %s136
      %s151 = sphi 0, %s137
      %s155 = sphi 0, %s155
      %s157 = sphi 0, %s155
      %s158 = sphi 0, %s157
      %s172 = sphi 0, %s158
      %s178 = sphi 0, %s180
      %s181 = sphi 0, %s178
      %s182 = sphi 0, %s181
      %s198 = sphi 0, %s182
    $region4: #{tpu_custom_call.1} parent=1 // loop_header_branch
      %19 = sbr.rel (%p17) target = $region8
    $region5: #{tpu_custom_call.1} parent=1 // loop_body
      %s21 = ssub.s32 %s16, 1
      %s22 = ssub.s32 %s16, 2
      %s23 = sadd.s32 %s16, 1
      %s24 = ssub.s32 %s16, %s23
      %p25 = scmp.eq.s32.totalorder %s24, 0
      %s27 = sadd.s32 %s26, 1
      %s28 = scalar_select %p25, %s26, %s27
      %p31 = pneg %p25
      %p32 = scmp.eq.s32.totalorder %s16, 1
      %p33 = por %p31, %p32
      %p34 = scmp.ne.s32.totalorder %s26, %s29
      %p35 = scmp.eq.s32.totalorder %s16, 0
      %p36 = por %p34, %p35
      %p37 = scmp.ne.s32.totalorder %s26, %s29
      %p38 = scmp.eq.s32.totalorder %s21, 1
      %p39 = por %p37, %p38
      %p40 = scmp.ne.s32.totalorder %s29, %s30
      %p41 = scmp.eq.s32.totalorder %s21, 0
      %p42 = por %p40, %p41
      %p43 = scmp.ne.s32.totalorder %s29, %s30
      %p44 = scmp.eq.s32.totalorder %s22, 1
      %p45 = por %p43, %p44
      %p47 = scmp.ne.s32.totalorder %s30, %s46
      %p48 = scmp.eq.s32.totalorder %s22, 0
      %p49 = por %p47, %p48
      %s51 = sadd.s32 %s50, 1
      %p54 = scmp.eq.s32.totalorder %s16, 1
      %p55 = scmp.ne.s32.totalorder %s50, %s52
      %p56 = scmp.eq.s32.totalorder %s16, 0
      %p57 = por %p55, %p56
      %p58 = scmp.ne.s32.totalorder %s50, %s52
      %p59 = scmp.eq.s32.totalorder %s21, 1
      %p60 = por %p58, %p59
      %p61 = scmp.ne.s32.totalorder %s52, %s53
      %p62 = scmp.eq.s32.totalorder %s21, 0
      %p63 = por %p61, %p62
      %p64 = scmp.ne.s32.totalorder %s52, %s53
      %p65 = scmp.eq.s32.totalorder %s22, 1
      %p66 = por %p64, %p65
      %p68 = scmp.ne.s32.totalorder %s53, %s67
      %p69 = scmp.eq.s32.totalorder %s22, 0
      %p70 = por %p68, %p69
      %s72 = sadd.s32 %s71, 1
      %p75 = scmp.eq.s32.totalorder %s16, 1
      %p76 = scmp.ne.s32.totalorder %s71, %s73
      %p77 = scmp.eq.s32.totalorder %s16, 0
      %p78 = por %p76, %p77
      %p79 = scmp.ne.s32.totalorder %s71, %s73
      %p80 = scmp.eq.s32.totalorder %s21, 1
      %p81 = por %p79, %p80
      %p82 = scmp.ne.s32.totalorder %s73, %s74
      %p83 = scmp.eq.s32.totalorder %s21, 0
      %p84 = por %p82, %p83
      %p85 = scmp.ne.s32.totalorder %s73, %s74
      %p86 = scmp.eq.s32.totalorder %s22, 1
      %p87 = por %p85, %p86
      %p89 = scmp.ne.s32.totalorder %s74, %s88
      %p90 = scmp.eq.s32.totalorder %s22, 0
      %p91 = por %p89, %p90
      %s93 = sadd.s32 %s92, 1
      %p96 = scmp.eq.s32.totalorder %s16, 1
      %p97 = scmp.ne.s32.totalorder %s92, %s94
      %p98 = scmp.eq.s32.totalorder %s16, 0
      %p99 = por %p97, %p98
      %p100 = scmp.ne.s32.totalorder %s92, %s94
      %p101 = scmp.eq.s32.totalorder %s21, 1
      %p102 = por %p100, %p101
      %p103 = scmp.ne.s32.totalorder %s94, %s95
      %p104 = scmp.eq.s32.totalorder %s21, 0
      %p105 = por %p103, %p104
      %p106 = scmp.ne.s32.totalorder %s94, %s95
      %p107 = scmp.eq.s32.totalorder %s22, 1
      %p108 = por %p106, %p107
      %p110 = scmp.ne.s32.totalorder %s95, %s109
      %p111 = scmp.eq.s32.totalorder %s22, 0
      %p112 = por %p110, %p111
      %s114 = sadd.s32 %s113, 1
      %p117 = scmp.eq.s32.totalorder %s16, 1
      %p118 = scmp.ne.s32.totalorder %s113, %s115
      %p119 = scmp.eq.s32.totalorder %s16, 0
      %p120 = por %p118, %p119
      %p121 = scmp.ne.s32.totalorder %s113, %s115
      %p122 = scmp.eq.s32.totalorder %s21, 1
      %p123 = por %p121, %p122
      %p124 = scmp.ne.s32.totalorder %s115, %s116
      %p125 = scmp.eq.s32.totalorder %s21, 0
      %p126 = por %p124, %p125
      %p127 = scmp.ne.s32.totalorder %s115, %s116
      %p128 = scmp.eq.s32.totalorder %s22, 1
      %p129 = por %p127, %p128
      %p131 = scmp.ne.s32.totalorder %s116, %s130
      %p132 = scmp.eq.s32.totalorder %s22, 0
      %p133 = por %p131, %p132
      %s135 = sadd.s32 %s134, 1
      %p138 = scmp.eq.s32.totalorder %s16, 1
      %p139 = scmp.ne.s32.totalorder %s134, %s136
      %p140 = scmp.eq.s32.totalorder %s16, 0
      %p141 = por %p139, %p140
      %p142 = scmp.ne.s32.totalorder %s134, %s136
      %p143 = scmp.eq.s32.totalorder %s21, 1
      %p144 = por %p142, %p143
      %p145 = scmp.ne.s32.totalorder %s136, %s137
      %p146 = scmp.eq.s32.totalorder %s21, 0
      %p147 = por %p145, %p146
      %p148 = scmp.ne.s32.totalorder %s136, %s137
      %p149 = scmp.eq.s32.totalorder %s22, 1
      %p150 = por %p148, %p149
      %p152 = scmp.ne.s32.totalorder %s137, %s151
      %p153 = scmp.eq.s32.totalorder %s22, 0
      %p154 = por %p152, %p153
      %s156 = sadd.s32 %s155, 1
      %p159 = scmp.eq.s32.totalorder %s16, 1
      %p160 = scmp.ne.s32.totalorder %s155, %s157
      %p161 = scmp.eq.s32.totalorder %s16, 0
      %p162 = por %p160, %p161
      %p163 = scmp.ne.s32.totalorder %s155, %s157
      %p164 = scmp.eq.s32.totalorder %s21, 1
      %p165 = por %p163, %p164
      %p166 = scmp.ne.s32.totalorder %s157, %s158
      %p167 = scmp.eq.s32.totalorder %s21, 0
      %p168 = por %p166, %p167
      %p169 = scmp.ne.s32.totalorder %s157, %s158
      %p170 = scmp.eq.s32.totalorder %s22, 1
      %p171 = por %p169, %p170
      %p173 = scmp.ne.s32.totalorder %s158, %s172
      %p174 = scmp.eq.s32.totalorder %s22, 0
      %p175 = por %p173, %p174
      %s176 = ssub.s32 %s16, %s23
      %p177 = scmp.eq.s32.totalorder %s176, 0
      %s179 = sadd.s32 %s178, 1
      %s180 = scalar_select %p177, %s178, %s179
      %p183 = pneg %p177
      %p184 = scmp.eq.s32.totalorder %s16, 1
      %p185 = por %p183, %p184
      %p186 = scmp.ne.s32.totalorder %s178, %s181
      %p187 = scmp.eq.s32.totalorder %s16, 0
      %p188 = por %p186, %p187
      %p189 = scmp.ne.s32.totalorder %s178, %s181
      %p190 = scmp.eq.s32.totalorder %s21, 1
      %p191 = por %p189, %p190
      %p192 = scmp.ne.s32.totalorder %s181, %s182
      %p193 = scmp.eq.s32.totalorder %s21, 0
      %p194 = por %p192, %p193
      %p195 = scmp.ne.s32.totalorder %s181, %s182
      %p196 = scmp.eq.s32.totalorder %s22, 1
      %p197 = por %p195, %p196
      %p199 = scmp.ne.s32.totalorder %s182, %s198
      %p200 = scmp.eq.s32.totalorder %s22, 0
      %p201 = por %p199, %p200
      %p202 = scmp.le.s32.totalorder 1, %s16
      %p203 = scmp.lt.s32.totalorder %s16, 3
      %p204 = pnand %p202, %p203
      %p205 = pneg %p204
      // Predicated region
      $region9: #{tpu_custom_call.1} parent=5 // pred_check
        _
      $region10: #{tpu_custom_call.1} parent=5 // pred_check_branch
        %207 = sbr.rel (%p204) target = $region12
      $region11: #{tpu_custom_call.1} parent=5 // pred_region
        %s208 = ssub.s32 %s16, 1
        // Predicated region
        $region13: #{tpu_custom_call.1} parent=11 // pred_check
          %p209 = pneg %p63
        $region14: #{tpu_custom_call.1} parent=11 // pred_check_branch
          %211 = sbr.rel (%p209) target = $region16
        $region15: #{tpu_custom_call.1} parent=11 // pred_region
          _
        $region16: #{tpu_custom_call.1} parent=11 // pred_fallthru
          _
        // Predicated region
        $region17: #{tpu_custom_call.1} parent=11 // pred_check
          %p212 = pneg %p84
        $region18: #{tpu_custom_call.1} parent=11 // pred_check_branch
          %214 = sbr.rel (%p212) target = $region20
        $region19: #{tpu_custom_call.1} parent=11 // pred_region
          _
        $region20: #{tpu_custom_call.1} parent=11 // pred_fallthru
          _
        // Predicated region
        $region21: #{tpu_custom_call.1} parent=11 // pred_check
          %p215 = pneg %p105
        $region22: #{tpu_custom_call.1} parent=11 // pred_check_branch
          %217 = sbr.rel (%p215) target = $region24
        $region23: #{tpu_custom_call.1} parent=11 // pred_region
          _
        $region24: #{tpu_custom_call.1} parent=11 // pred_fallthru
          _
        // Predicated region
        $region25: #{tpu_custom_call.1} parent=11 // pred_check
          %p218 = pneg %p126
        $region26: #{tpu_custom_call.1} parent=11 // pred_check_branch
          %220 = sbr.rel (%p218) target = $region28
        $region27: #{tpu_custom_call.1} parent=11 // pred_region
          _
        $region28: #{tpu_custom_call.1} parent=11 // pred_fallthru
          _
        // Predicated region
        $region29: #{tpu_custom_call.1} parent=11 // pred_check
          %p221 = pneg %p147
        $region30: #{tpu_custom_call.1} parent=11 // pred_check_branch
          %223 = sbr.rel (%p221) target = $region32
        $region31: #{tpu_custom_call.1} parent=11 // pred_region
          _
        $region32: #{tpu_custom_call.1} parent=11 // pred_fallthru
          _
        // Predicated region
        $region33: #{tpu_custom_call.1} parent=11 // pred_check
          %p224 = pneg %p168
        $region34: #{tpu_custom_call.1} parent=11 // pred_check_branch
          %226 = sbr.rel (%p224) target = $region36
        $region35: #{tpu_custom_call.1} parent=11 // pred_region
          _
        $region36: #{tpu_custom_call.1} parent=11 // pred_fallthru
          _
      $region12: #{tpu_custom_call.1} parent=5 // pred_fallthru
        _
      %p227 = scmp.lt.s32.totalorder %s16, 2
      // Predicated region
      $region37: #{tpu_custom_call.1} parent=5 // pred_check
        %p228 = pneg %p227
      $region38: #{tpu_custom_call.1} parent=5 // pred_check_branch
        %230 = sbr.rel (%p228) target = $region40
      $region39: #{tpu_custom_call.1} parent=5 // pred_region
        // Predicated region
        $region41: #{tpu_custom_call.1} parent=39 // pred_check
          %p231 = pneg %p36
        $region42: #{tpu_custom_call.1} parent=39 // pred_check_branch
          %233 = sbr.rel (%p231) target = $region44
        $region43: #{tpu_custom_call.1} parent=39 // pred_region
          %s234 = sand.u32 %s26, 1
          %s235 = sand.u32 %s26, 1
          %s236 = smul.addr %s235, 32
          %s237 = scalar_lea.vmem [#allocation2], %s236
          %s238 = smul.addr %s16, 8
          %s239 = scalar_lea.vmem %s0, %s238
          // Predicated region
          $region45: #{tpu_custom_call.1} parent=43 // pred_check
            _
          $region46: #{tpu_custom_call.1} parent=43 // pred_check_branch
            %241 = sbr.rel (0) target = $region48
          $region47: #{tpu_custom_call.1} parent=43 // pred_region
            // Predicated region
            $region49: #{tpu_custom_call.1} parent=47 // pred_check
              _
            $region50: #{tpu_custom_call.1} parent=47 // pred_check_branch
              %243 = sbr.rel (0) target = $region52
            $region51: #{tpu_custom_call.1} parent=47 // pred_region
              // Predicated region
              $region64: #{tpu_custom_call.1} parent=51 // pred_check
                _
              $region65: #{tpu_custom_call.1} parent=51 // pred_check_branch
                %264 = sbr.rel (0) target = $region67
              $region66: #{tpu_custom_call.1} parent=51 // pred_region
                loop: start=0, step=1, limit=1
                $region68: #{tpu_custom_call.1} parent=66 // loop_pre_header
                  _
                $region69: #{tpu_custom_call.1} parent=66 // loop_header
                  %s266 = sphi 0, %s270
                  %p267 = scmp.ge.s32.totalorder %s266, 1
                  %s271 = sphi %s239, %s239
                  %s272 = sphi %s237, %s237
                $region70: #{tpu_custom_call.1} parent=66 // loop_header_branch
                  %269 = sbr.rel (%p267) target = $region74
                $region71: #{tpu_custom_call.1} parent=66 // loop_body
                  %v273 = vld [vmem:[%s271] sm:$0xff]
                  %274 = vst [vmem:[%s272] sm:$0xff] %v273
                  %v275 = vld [vmem:[%s271 + $0x10] sm:$0xff]
                  %276 = vst [vmem:[%s272 + $0x8] sm:$0xff] %v275
                  %v277 = vld [vmem:[%s271 + $0x20] sm:$0xff]
                  %278 = vst [vmem:[%s272 + $0x10] sm:$0xff] %v277
                  %v279 = vld [vmem:[%s271 + $0x30] sm:$0xff]
                  %280 = vst [vmem:[%s272 + $0x18] sm:$0xff] %v279
                $region72: #{tpu_custom_call.1} parent=66 // loop_footer
                  %s270 = sadd.s32 1, %s266
                $region73: #{tpu_custom_call.1} parent=66 // loop_footer_branch
                  %265 = sbr.rel target = $region69
                $region74: #{tpu_custom_call.1} parent=66 // loop_exit
                  _
              $region67: #{tpu_custom_call.1} parent=51 // pred_fallthru
                _
              // Predicated region
              $region75: #{tpu_custom_call.1} parent=51 // pred_check
                _
              $region76: #{tpu_custom_call.1} parent=51 // pred_check_branch
                %282 = sbr.rel target = $region78
              $region77: #{tpu_custom_call.1} parent=51 // pred_region
                _
              $region78: #{tpu_custom_call.1} parent=51 // pred_fallthru
                _
            $region52: #{tpu_custom_call.1} parent=47 // pred_fallthru
              _
            // Predicated region
            $region53: #{tpu_custom_call.1} parent=47 // pred_check
              _
            $region54: #{tpu_custom_call.1} parent=47 // pred_check_branch
              %245 = sbr.rel target = $region56
            $region55: #{tpu_custom_call.1} parent=47 // pred_region
              loop: start=0, step=1, limit=1
              $region57: #{tpu_custom_call.1} parent=55 // loop_pre_header
                _
              $region58: #{tpu_custom_call.1} parent=55 // loop_header
                %s248 = sphi 0, %s252
                %p249 = scmp.ge.s32.totalorder %s248, 1
                %s253 = sphi %s239, %s239
                %s254 = sphi %s237, %s237
              $region59: #{tpu_custom_call.1} parent=55 // loop_header_branch
                %251 = sbr.rel (%p249) target = $region63
              $region60: #{tpu_custom_call.1} parent=55 // loop_body
                %v255 = vld [vmem:[%s253] sm:$0xff]
                %256 = vst [vmem:[%s254] sm:$0xff] %v255
                %v257 = vld [vmem:[%s253 + $0x10] sm:$0xff]
                %258 = vst [vmem:[%s254 + $0x8] sm:$0xff] %v257
                %v259 = vld [vmem:[%s253 + $0x20] sm:$0xff]
                %260 = vst [vmem:[%s254 + $0x10] sm:$0xff] %v259
                %v261 = vld [vmem:[%s253 + $0x30] sm:$0xff]
                %262 = vst [vmem:[%s254 + $0x18] sm:$0xff] %v261
              $region61: #{tpu_custom_call.1} parent=55 // loop_footer
                %s252 = sadd.s32 1, %s248
              $region62: #{tpu_custom_call.1} parent=55 // loop_footer_branch
                %247 = sbr.rel target = $region58
              $region63: #{tpu_custom_call.1} parent=55 // loop_exit
                _
            $region56: #{tpu_custom_call.1} parent=47 // pred_fallthru
              _
          $region48: #{tpu_custom_call.1} parent=43 // pred_fallthru
            _
          %283 = vnop
        $region44: #{tpu_custom_call.1} parent=39 // pred_fallthru
          _
      $region40: #{tpu_custom_call.1} parent=5 // pred_fallthru
        _
      %p284 = scmp.le.s32.totalorder 1, %s16
      %p285 = scmp.lt.s32.totalorder %s16, 3
      %p286 = pnand %p284, %p285
      %p287 = pneg %p286
      // Predicated region
      $region79: #{tpu_custom_call.1} parent=5 // pred_check
        _
      $region80: #{tpu_custom_call.1} parent=5 // pred_check_branch
        %289 = sbr.rel (%p286) target = $region82
      $region81: #{tpu_custom_call.1} parent=5 // pred_region
        %s290 = ssub.s32 %s16, 1
        %s291 = sand.u32 %s29, 1
        %s292 = sand.u32 %s29, 1
        %s293 = smul.addr %s292, 32
        %s294 = scalar_lea.vmem [#allocation2], %s293
        // Predicated region
        $region83: #{tpu_custom_call.1} parent=81 // pred_check
          %p295 = pneg %p42
        $region84: #{tpu_custom_call.1} parent=81 // pred_check_branch
          %297 = sbr.rel (%p295) target = $region86
        $region85: #{tpu_custom_call.1} parent=81 // pred_region
          _
        $region86: #{tpu_custom_call.1} parent=81 // pred_fallthru
          _
        %s298 = sand.u32 %s29, 1
        %s299 = sand.u32 %s29, 1
        %s300 = smul.addr %s299, 32
        %s301 = scalar_lea.vmem [#allocation2], %s300
        %p302 = pneg %p42
        %p303 = pneg %p39
        %p304 = pneg %p63
        %p305 = pneg %p60
        %p306 = pneg %p84
        %p307 = pneg %p81
        %p308 = pneg %p105
        %p309 = pneg %p102
        %p310 = pneg %p126
        %p311 = pneg %p123
        %p312 = pneg %p147
        %p313 = pneg %p144
        %p314 = pneg %p168
        %p315 = pneg %p165
        %p316 = pneg %p194
        %p317 = pneg %p191
        %s318 = sand.u32 %s181, 1
        %s319 = scalar_lea.sflag [#allocation4], %s318
        %s320 = sand.u32 %s181, 1
        %s321 = smul.addr %s320, 8
        %s322 = scalar_lea.vmem [#allocation3], %s321
        %v323 = vld [vmem:[%s294] sm:$0xff]
        %v324 = vld [vmem:[%s294 + $0x8] sm:$0xff]
        %v325 = vld [vmem:[%s294 + $0x10] sm:$0xff]
        %v326 = vld [vmem:[%s294 + $0x18] sm:$0xff]
        %v327 = vld [vmem:[%s1] sm:$0xff]
        %v328 = vld [vmem:[%s1 + $0x8] sm:$0xff]
        %v329 = vld [vmem:[%s1 + $0x10] sm:$0xff]
        %v330 = vld [vmem:[%s1 + $0x18] sm:$0xff]
        %v331 = vld [vmem:[%s1 + $0x20] sm:$0xff]
        %v332 = vld [vmem:[%s1 + $0x28] sm:$0xff]
        %v333 = vld [vmem:[%s1 + $0x30] sm:$0xff]
        %v334 = vld [vmem:[%s1 + $0x38] sm:$0xff]
        %v335 = vld [vmem:[%s2] sm:$0xff]
        %v336 = vld [vmem:[%s2 + $0x8] sm:$0xff]
        %v337 = vld [vmem:[%s2 + $0x10] sm:$0xff]
        %v338 = vld [vmem:[%s2 + $0x18] sm:$0xff]
        %v339 = vld [vmem:[%s2 + $0x20] sm:$0xff]
        %v340 = vld [vmem:[%s2 + $0x28] sm:$0xff]
        %v341 = vld [vmem:[%s2 + $0x30] sm:$0xff]
        %v342 = vld [vmem:[%s2 + $0x38] sm:$0xff]
        %344 = vset.pattern.permute.xlu0 0
        %345 = vperm.xlu0 %344, %v335
        %v346 = vpop.permute.xlu0 %345
        %349 = vset.pattern.permute.xlu0 0
        %350 = vperm.xlu0 %349, %v336
        %v351 = vpop.permute.xlu0 %350
        %354 = vset.pattern.permute.xlu0 0
        %355 = vperm.xlu0 %354, %v337
        %v356 = vpop.permute.xlu0 %355
        %359 = vset.pattern.permute.xlu0 0
        %360 = vperm.xlu0 %359, %v338
        %v361 = vpop.permute.xlu0 %360
        %364 = vset.pattern.permute.xlu0 0
        %365 = vperm.xlu0 %364, %v339
        %v366 = vpop.permute.xlu0 %365
        %369 = vset.pattern.permute.xlu0 0
        %370 = vperm.xlu0 %369, %v340
        %v371 = vpop.permute.xlu0 %370
        %374 = vset.pattern.permute.xlu0 0
        %375 = vperm.xlu0 %374, %v341
        %v376 = vpop.permute.xlu0 %375
        %379 = vset.pattern.permute.xlu0 0
        %380 = vperm.xlu0 %379, %v342
        %v381 = vpop.permute.xlu0 %380
        %vm383 = vcmask 261120
        %v385 = vsel %vm383, %v327, 0
        %v388 = vsel %vm383, %v328, 0
        %v391 = vsel %vm383, %v329, 0
        %v394 = vsel %vm383, %v330, 0
        %v397 = vsel %vm383, %v331, 0
        %v400 = vsel %vm383, %v332, 0
        %v403 = vsel %vm383, %v333, 0
        %v406 = vsel %vm383, %v334, 0
        %408 = vmatprep.subr.mxu0 0.0
        %409 = vmatpush1.msra.mxu0 %v323
        %410 = vmatprep.subr.mxu0 0.0
        %411 = vmatpush1.msra.mxu0 %v324
        %412 = vmatprep.subr.mxu0 0.0
        %413 = vmatpush1.msra.mxu0 %v325
        %414 = vmatprep.subr.mxu0 0.0
        %415 = vmatpush1.msra.mxu0 %v326
        %416 = vmatprep.subr.mxu0 0.0
        %417 = vmatpush1.msra.mxu0 0.0
        %418 = vmatprep.subr.mxu0 0.0
        %419 = vmatpush1.msra.mxu0 0.0
        %420 = vmatprep.subr.mxu0 0.0
        %421 = vmatpush1.msra.mxu0 0.0
        %422 = vmatprep.subr.mxu0 0.0
        %423 = vmatpush1.msra.mxu0 0.0
        %424 = vmatprep.subr.mxu0 0.0
        %425 = vmatpush1.msra.mxu0 0.0
        %426 = vmatprep.subr.mxu0 0.0
        %427 = vmatpush1.msra.mxu0 0.0
        %428 = vmatprep.subr.mxu0 0.0
        %429 = vmatpush1.msra.mxu0 0.0
        %430 = vmatprep.subr.mxu0 0.0
        %431 = vmatpush1.msra.mxu0 0.0
        %432 = vmatprep.subr.mxu0 0.0
        %433 = vmatpush1.msra.mxu0 0.0
        %434 = vmatprep.subr.mxu0 0.0
        %435 = vmatpush1.msra.mxu0 0.0
        %436 = vmatprep.subr.mxu0 0.0
        %437 = vmatpush1.msra.mxu0 0.0
        %438 = vmatprep.subr.mxu0 0.0
        %439 = vmatpush1.msra.mxu0 0.0
        %440 = vmatprep.subr.mxu0 0.0
        %441 = vmatpush1.msra.mxu0 0.0
        %442 = vmatprep.subr.mxu0 0.0
        %443 = vmatpush1.msra.mxu0 0.0
        %444 = vmatprep.subr.mxu0 0.0
        %445 = vmatpush1.msra.mxu0 0.0
        %446 = vmatprep.subr.mxu0 0.0
        %447 = vmatpush1.msra.mxu0 0.0
        %448 = vmatprep.subr.mxu0 0.0
        %449 = vmatpush1.msra.mxu0 0.0
        %450 = vmatprep.subr.mxu0 0.0
        %451 = vmatpush1.msra.mxu0 0.0
        %452 = vmatprep.subr.mxu0 0.0
        %453 = vmatpush1.msra.mxu0 0.0
        %454 = vmatprep.subr.mxu0 0.0
        %455 = vmatpush1.msra.mxu0 0.0
        %456 = vmatprep.subr.mxu0 0.0
        %457 = vmatpush1.msra.mxu0 0.0
        %458 = vmatprep.subr.mxu0 0.0
        %459 = vmatpush1.msra.mxu0 0.0
        %460 = vmatprep.subr.mxu0 0.0
        %461 = vmatpush1.msra.mxu0 0.0
        %462 = vmatprep.subr.mxu0 0.0
        %463 = vmatpush1.msra.mxu0 0.0
        %464 = vmatprep.subr.mxu0 0.0
        %465 = vmatpush1.msra.mxu0 0.0
        %466 = vmatprep.subr.mxu0 0.0
        %467 = vmatpush1.msra.mxu0 0.0
        %468 = vmatprep.subr.mxu0 0.0
        %469 = vmatpush1.msra.mxu0 0.0
        %470 = vmatprep.subr.mxu0 0.0
        %471 = vmatpush1.msra.mxu0 0.0
        %472 = vmatprep.mubr.f32.mxu0 0.0
        %473 = vmatmul.mubr.f32.gmra.mrb[0].mxu0 %v385
        %v474 = vpop.f32.mrb[0].mxu0
        %v475 = vadd.f32 %v346, %v474
        %v476 = vpop.f32.mrb[0].mxu0
        %477 = vmatprep.mubr.f32.mxu0 0.0
        %478 = vmatmul.mubr.f32.gmra.mrb[0].mxu0 %v388
        %v479 = vpop.f32.mrb[0].mxu0
        %v480 = vadd.f32 %v351, %v479
        %v481 = vpop.f32.mrb[0].mxu0
        %482 = vmatprep.mubr.f32.mxu0 0.0
        %483 = vmatmul.mubr.f32.gmra.mrb[0].mxu0 %v391
        %v484 = vpop.f32.mrb[0].mxu0
        %v485 = vadd.f32 %v356, %v484
        %v486 = vpop.f32.mrb[0].mxu0
        %487 = vmatprep.mubr.f32.mxu0 0.0
        %488 = vmatmul.mubr.f32.gmra.mrb[0].mxu0 %v394
        %v489 = vpop.f32.mrb[0].mxu0
        %v490 = vadd.f32 %v361, %v489
        %v491 = vpop.f32.mrb[0].mxu0
        %492 = vmatprep.mubr.f32.mxu0 0.0
        %493 = vmatmul.mubr.f32.gmra.mrb[0].mxu0 %v397
        %v494 = vpop.f32.mrb[0].mxu0
        %v495 = vadd.f32 %v366, %v494
        %v496 = vpop.f32.mrb[0].mxu0
        %497 = vmatprep.mubr.f32.mxu0 0.0
        %498 = vmatmul.mubr.f32.gmra.mrb[0].mxu0 %v400
        %v499 = vpop.f32.mrb[0].mxu0
        %v500 = vadd.f32 %v371, %v499
        %v501 = vpop.f32.mrb[0].mxu0
        %502 = vmatprep.mubr.f32.mxu0 0.0
        %503 = vmatmul.mubr.f32.gmra.mrb[0].mxu0 %v403
        %v504 = vpop.f32.mrb[0].mxu0
        %v505 = vadd.f32 %v376, %v504
        %v506 = vpop.f32.mrb[0].mxu0
        %507 = vmatprep.mubr.f32.mxu0 0.0
        %508 = vmatmul.mubr.f32.gmra.mrb[0].mxu0 %v406
        %v509 = vpop.f32.mrb[0].mxu0
        %v510 = vadd.f32 %v381, %v509
        %v511 = vpop.f32.mrb[0].mxu0
        %512 = vdwg.mxu0
        %v513 = vmax.f32 %v475, 0.0
        %v514 = vmax.f32 %v480, 0.0
        %v515 = vmax.f32 %v485, 0.0
        %v516 = vmax.f32 %v490, 0.0
        %v517 = vmax.f32 %v495, 0.0
        %v518 = vmax.f32 %v500, 0.0
        %v519 = vmax.f32 %v505, 0.0
        %v520 = vmax.f32 %v510, 0.0
        %v521 = vld [vmem:[%s3] sm:$0xff]
        %v522 = vld [vmem:[%s3 + $0x8] sm:$0xff]
        %v523 = vld [vmem:[%s3 + $0x10] sm:$0xff]
        %v524 = vld [vmem:[%s3 + $0x18] sm:$0xff]
        %v525 = vld [vmem:[%s4] sm:$0xff]
        %v526 = vld [vmem:[%s4 + $0x8] sm:$0xff]
        %v527 = vld [vmem:[%s4 + $0x10] sm:$0xff]
        %v528 = vld [vmem:[%s4 + $0x18] sm:$0xff]
        %530 = vset.pattern.permute.xlu0 0
        %531 = vperm.xlu0 %530, %v525
        %v532 = vpop.permute.xlu0 %531
        %535 = vset.pattern.permute.xlu0 0
        %536 = vperm.xlu0 %535, %v526
        %v537 = vpop.permute.xlu0 %536
        %540 = vset.pattern.permute.xlu0 0
        %541 = vperm.xlu0 %540, %v527
        %v542 = vpop.permute.xlu0 %541
        %545 = vset.pattern.permute.xlu0 0
        %546 = vperm.xlu0 %545, %v528
        %v547 = vpop.permute.xlu0 %546
        %vm549 = vcmask 523264
        %v551 = vsel %vm549, %v521, 0
        %v554 = vsel %vm549, %v522, 0
        %v557 = vsel %vm549, %v523, 0
        %v560 = vsel %vm549, %v524, 0
        %562 = vmatprep.subr.mxu0 0.0
        %563 = vmatpush1.msra.mxu0 %v513
        %564 = vmatprep.subr.mxu0 0.0
        %565 = vmatpush1.msra.mxu0 %v514
        %566 = vmatprep.subr.mxu0 0.0
        %567 = vmatpush1.msra.mxu0 %v515
        %568 = vmatprep.subr.mxu0 0.0
        %569 = vmatpush1.msra.mxu0 %v516
        %570 = vmatprep.subr.mxu0 0.0
        %571 = vmatpush1.msra.mxu0 %v517
        %572 = vmatprep.subr.mxu0 0.0
        %573 = vmatpush1.msra.mxu0 %v518
        %574 = vmatprep.subr.mxu0 0.0
        %575 = vmatpush1.msra.mxu0 %v519
        %576 = vmatprep.subr.mxu0 0.0
        %577 = vmatpush1.msra.mxu0 %v520
        %578 = vmatprep.subr.mxu0 0.0
        %579 = vmatpush1.msra.mxu0 0.0
        %580 = vmatprep.subr.mxu0 0.0
        %581 = vmatpush1.msra.mxu0 0.0
        %582 = vmatprep.subr.mxu0 0.0
        %583 = vmatpush1.msra.mxu0 0.0
        %584 = vmatprep.subr.mxu0 0.0
        %585 = vmatpush1.msra.mxu0 0.0
        %586 = vmatprep.subr.mxu0 0.0
        %587 = vmatpush1.msra.mxu0 0.0
        %588 = vmatprep.subr.mxu0 0.0
        %589 = vmatpush1.msra.mxu0 0.0
        %590 = vmatprep.subr.mxu0 0.0
        %591 = vmatpush1.msra.mxu0 0.0
        %592 = vmatprep.subr.mxu0 0.0
        %593 = vmatpush1.msra.mxu0 0.0
        %594 = vmatprep.subr.mxu0 0.0
        %595 = vmatpush1.msra.mxu0 0.0
        %596 = vmatprep.subr.mxu0 0.0
        %597 = vmatpush1.msra.mxu0 0.0
        %598 = vmatprep.subr.mxu0 0.0
        %599 = vmatpush1.msra.mxu0 0.0
        %600 = vmatprep.subr.mxu0 0.0
        %601 = vmatpush1.msra.mxu0 0.0
        %602 = vmatprep.subr.mxu0 0.0
        %603 = vmatpush1.msra.mxu0 0.0
        %604 = vmatprep.subr.mxu0 0.0
        %605 = vmatpush1.msra.mxu0 0.0
        %606 = vmatprep.subr.mxu0 0.0
        %607 = vmatpush1.msra.mxu0 0.0
        %608 = vmatprep.subr.mxu0 0.0
        %609 = vmatpush1.msra.mxu0 0.0
        %610 = vmatprep.subr.mxu0 0.0
        %611 = vmatpush1.msra.mxu0 0.0
        %612 = vmatprep.subr.mxu0 0.0
        %613 = vmatpush1.msra.mxu0 0.0
        %614 = vmatprep.subr.mxu0 0.0
        %615 = vmatpush1.msra.mxu0 0.0
        %616 = vmatprep.subr.mxu0 0.0
        %617 = vmatpush1.msra.mxu0 0.0
        %618 = vmatprep.subr.mxu0 0.0
        %619 = vmatpush1.msra.mxu0 0.0
        %620 = vmatprep.subr.mxu0 0.0
        %621 = vmatpush1.msra.mxu0 0.0
        %622 = vmatprep.subr.mxu0 0.0
        %623 = vmatpush1.msra.mxu0 0.0
        %624 = vmatprep.subr.mxu0 0.0
        %625 = vmatpush1.msra.mxu0 0.0
        %626 = vmatprep.mubr.f32.mxu0 0.0
        %627 = vmatmul.mubr.f32.gmra.mrb[0].mxu0 %v551
        %v628 = vpop.f32.mrb[0].mxu0
        %v629 = vadd.f32 %v532, %v628
        %v630 = vpop.f32.mrb[0].mxu0
        %631 = vmatprep.mubr.f32.mxu0 0.0
        %632 = vmatmul.mubr.f32.gmra.mrb[0].mxu0 %v554
        %v633 = vpop.f32.mrb[0].mxu0
        %v634 = vadd.f32 %v537, %v633
        %v635 = vpop.f32.mrb[0].mxu0
        %636 = vmatprep.mubr.f32.mxu0 0.0
        %637 = vmatmul.mubr.f32.gmra.mrb[0].mxu0 %v557
        %v638 = vpop.f32.mrb[0].mxu0
        %v639 = vadd.f32 %v542, %v638
        %v640 = vpop.f32.mrb[0].mxu0
        %641 = vmatprep.mubr.f32.mxu0 0.0
        %642 = vmatmul.mubr.f32.gmra.mrb[0].mxu0 %v560
        %v643 = vpop.f32.mrb[0].mxu0
        %v644 = vadd.f32 %v547, %v643
        %v645 = vpop.f32.mrb[0].mxu0
        %646 = vdwg.mxu0
        %v647 = vmax.f32 %v629, 0.0
        %v648 = vmax.f32 %v634, 0.0
        %v649 = vmax.f32 %v639, 0.0
        %v650 = vmax.f32 %v644, 0.0
        %v651 = vld [vmem:[%s5] sm:$0xff]
        %v652 = vld [vmem:[%s6] sm:$0xff]
        %654 = vset.pattern.permute.xlu0 0
        %655 = vperm.xlu0 %654, %v652
        %v656 = vpop.permute.xlu0 %655
        %v659 = vsel %vm383, %v651, 0
        %661 = vmatprep.subr.mxu0 0.0
        %662 = vmatpush1.msra.mxu0 %v647
        %663 = vmatprep.subr.mxu0 0.0
        %664 = vmatpush1.msra.mxu0 %v648
        %665 = vmatprep.subr.mxu0 0.0
        %666 = vmatpush1.msra.mxu0 %v649
        %667 = vmatprep.subr.mxu0 0.0
        %668 = vmatpush1.msra.mxu0 %v650
        %669 = vmatprep.subr.mxu0 0.0
        %670 = vmatpush1.msra.mxu0 0.0
        %671 = vmatprep.subr.mxu0 0.0
        %672 = vmatpush1.msra.mxu0 0.0
        %673 = vmatprep.subr.mxu0 0.0
        %674 = vmatpush1.msra.mxu0 0.0
        %675 = vmatprep.subr.mxu0 0.0
        %676 = vmatpush1.msra.mxu0 0.0
        %677 = vmatprep.subr.mxu0 0.0
        %678 = vmatpush1.msra.mxu0 0.0
        %679 = vmatprep.subr.mxu0 0.0
        %680 = vmatpush1.msra.mxu0 0.0
        %681 = vmatprep.subr.mxu0 0.0
        %682 = vmatpush1.msra.mxu0 0.0
        %683 = vmatprep.subr.mxu0 0.0
        %684 = vmatpush1.msra.mxu0 0.0
        %685 = vmatprep.subr.mxu0 0.0
        %686 = vmatpush1.msra.mxu0 0.0
        %687 = vmatprep.subr.mxu0 0.0
        %688 = vmatpush1.msra.mxu0 0.0
        %689 = vmatprep.subr.mxu0 0.0
        %690 = vmatpush1.msra.mxu0 0.0
        %691 = vmatprep.subr.mxu0 0.0
        %692 = vmatpush1.msra.mxu0 0.0
        %693 = vmatprep.subr.mxu0 0.0
        %694 = vmatpush1.msra.mxu0 0.0
        %695 = vmatprep.subr.mxu0 0.0
        %696 = vmatpush1.msra.mxu0 0.0
        %697 = vmatprep.subr.mxu0 0.0
        %698 = vmatpush1.msra.mxu0 0.0
        %699 = vmatprep.subr.mxu0 0.0
        %700 = vmatpush1.msra.mxu0 0.0
        %701 = vmatprep.subr.mxu0 0.0
        %702 = vmatpush1.msra.mxu0 0.0
        %703 = vmatprep.subr.mxu0 0.0
        %704 = vmatpush1.msra.mxu0 0.0
        %705 = vmatprep.subr.mxu0 0.0
        %706 = vmatpush1.msra.mxu0 0.0
        %707 = vmatprep.subr.mxu0 0.0
        %708 = vmatpush1.msra.mxu0 0.0
        %709 = vmatprep.subr.mxu0 0.0
        %710 = vmatpush1.msra.mxu0 0.0
        %711 = vmatprep.subr.mxu0 0.0
        %712 = vmatpush1.msra.mxu0 0.0
        %713 = vmatprep.subr.mxu0 0.0
        %714 = vmatpush1.msra.mxu0 0.0
        %715 = vmatprep.subr.mxu0 0.0
        %716 = vmatpush1.msra.mxu0 0.0
        %717 = vmatprep.subr.mxu0 0.0
        %718 = vmatpush1.msra.mxu0 0.0
        %719 = vmatprep.subr.mxu0 0.0
        %720 = vmatpush1.msra.mxu0 0.0
        %721 = vmatprep.subr.mxu0 0.0
        %722 = vmatpush1.msra.mxu0 0.0
        %723 = vmatprep.subr.mxu0 0.0
        %724 = vmatpush1.msra.mxu0 0.0
        %725 = vmatprep.mubr.f32.mxu0 0.0
        %726 = vmatmul.mubr.f32.gmra.mrb[0].mxu0 %v659
        %v727 = vpop.f32.mrb[0].mxu0
        %v728 = vadd.f32 %v656, %v727
        %v729 = vpop.f32.mrb[0].mxu0
        %730 = vdwg.mxu0
        %v731 = vrot.slane %v728, 4
        %v732 = vmax.f32 %v728, %v731
        %v733 = vrot.slane %v732, 2
        %v734 = vmax.f32 %v732, %v733
        %v735 = vrot.slane %v734, 1
        %v736 = vmax.f32 %v734, %v735
        %v737 = vsub.f32 %v728, %v736
        %v738 = vmul.f32 %v737, 1.442695
        %v739 = vpow.pop %v738
        %v740 = vrot.slane %v739, 4
        %v741 = vadd.f32 %v739, %v740
        %v742 = vrot.slane %v741, 2
        %v743 = vadd.f32 %v741, %v742
        %v744 = vrot.slane %v743, 1
        %v745 = vadd.f32 %v743, %v744
        %v746 = vrcp.pop %v745
        %v747 = vmul.f32 %v739, %v746
        %748 = vst [vmem:[%s322] sm:$0xff] %v747
        %s749 = sand.u32 %s181, 1
        %s750 = scalar_lea.sflag [#allocation4], %s749
        %s751 = sand.u32 %s181, 1
        %s752 = smul.addr %s751, 8
        %s753 = scalar_lea.vmem [#allocation3], %s752
        // Predicated region
        $region87: #{tpu_custom_call.1} parent=81 // pred_check
          %p754 = pneg %p191
        $region88: #{tpu_custom_call.1} parent=81 // pred_check_branch
          %756 = sbr.rel (%p754) target = $region90
        $region89: #{tpu_custom_call.1} parent=81 // pred_region
          %s758 = ssub.s32 128, 128
          %759 = vsyncadd %s750, %s758
          %s760 = smul.addr %s21, 128
          %s761 = scalar_lea.hbm %s7, %s760
          %s763 = sshll.u32 %s753, 4
          %s764 = int_to_ptr.vmem [resolvable:$true] %s763
          %766 = dma.vmem_to_hbm [thread:$0]  %s764, 128, %s761, %s750
        $region90: #{tpu_custom_call.1} parent=81 // pred_fallthru
          _
      $region82: #{tpu_custom_call.1} parent=5 // pred_fallthru
        _
      %p767 = scmp.le.s32.totalorder 2, %s16
      // Predicated region
      $region91: #{tpu_custom_call.1} parent=5 // pred_check
        %p768 = pneg %p767
      $region92: #{tpu_custom_call.1} parent=5 // pred_check_branch
        %770 = sbr.rel (%p768) target = $region94
      $region93: #{tpu_custom_call.1} parent=5 // pred_region
        %s771 = ssub.s32 %s16, 2
        // Predicated region
        $region95: #{tpu_custom_call.1} parent=93 // pred_check
          %p772 = pneg %p197
        $region96: #{tpu_custom_call.1} parent=93 // pred_check_branch
          %774 = sbr.rel (%p772) target = $region98
        $region97: #{tpu_custom_call.1} parent=93 // pred_region
          %s775 = sand.u32 %s182, 1
          %s776 = scalar_lea.sflag [#allocation4], %s775
          %s777 = sand.u32 %s182, 1
          %s778 = smul.addr %s777, 8
          %s779 = scalar_lea.vmem [#allocation3], %s778
          %780 = dma.done %s776, 128
        $region98: #{tpu_custom_call.1} parent=93 // pred_fallthru
          _
      $region94: #{tpu_custom_call.1} parent=5 // pred_fallthru
        _
    $region6: #{tpu_custom_call.1} parent=1 // loop_footer
      %s20 = sadd.s32 1, %s16
    $region7: #{tpu_custom_call.1} parent=1 // loop_footer_branch
      %15 = sbr.rel target = $region3
    $region8: #{tpu_custom_call.1} parent=1 // loop_exit
      _
    %781 = vsyncpa [#allocation4], 1
    %s782 = scalar_lea.sflag [#allocation4], 1
    %783 = vsyncpa %s782, 1

</llo_original>
